<compile_context>
chip_gen: v7x
topology: tpu7x:2x2x1
jax: 0.10.0
libtpu: 0.0.40
codegen_flags: <defaults>
</compile_context>

<pallas_src>
import functools

import jax
import jax.numpy as jnp
from jax.experimental import pallas as pl
from jax.experimental.pallas import tpu as pltpu


_LANES = 128
_VMEM = pl.BlockSpec(memory_space=pltpu.MemorySpace.VMEM)


# ----------------------------------------------------------------------------
# Fused Pallas kernel: entire iVAE forward in one pallas_call.
# ----------------------------------------------------------------------------
def ivae_fused_kernel(x_ref, u_ref, eps_ref, w_ref, b_ref, out_ref,
                      *, slope, dims, woff, brow):
  data_dim, aux_dim, latent_dim, hidden_dim = dims
  H, L, D, A = hidden_dim, latent_dim, data_dim, aux_dim
  H2 = 2 * H

  def dot_w(h, name, fan_in, fan_out):
    # MXU matmul: bf16 operands, f32 accumulation.  Static slab slice.
    r = woff[name]
    w = w_ref[r:r + fan_in, :fan_out]
    return jnp.dot(h.astype(jnp.bfloat16), w,
                   preferred_element_type=jnp.float32)

  def bias(name, fan_out):
    r = brow[name]
    return b_ref[r:r + 1, :fan_out]            # (1, fan_out) -> broadcasts

  def lrelu(h):                                # leaky_relu, slope in (0, 1)
    return jnp.maximum(h, slope * h)

  x = x_ref[...]
  u = u_ref[...]
  eps = eps_ref[...]

  # ---- prior_params(u): logl = MLP_logl(u); lambda = exp(logl) -------------
  h = lrelu(dot_w(u, "wl0", A, H) + bias("bl0", H))
  h = lrelu(dot_w(h, "wl1", H, H) + bias("bl1", H))
  logl = dot_w(h, "wl2", H, L) + bias("bl2", L)
  lam = jnp.exp(logl)

  # ---- encoder_params(x, u): packed [g | logv] chain ------------------------
  # First layer uses split weights instead of concat(x, u); last layer is two
  # lane-aligned dots so no in-vreg lane slicing is needed.
  h = lrelu(dot_w(x, "we0x", D, H2) + dot_w(u, "we0u", A, H2) + bias("be0", H2))
  h = lrelu(dot_w(h, "we1", H2, H2) + bias("be1", H2))
  g = dot_w(h, "we2g", H2, L) + bias("bg2", L)
  logv = dot_w(h, "we2v", H2, L) + bias("bv2", L)
  std = jnp.exp(0.5 * logv)                    # single EUP op
  v = std * std                                # VPU mul instead of exp(logv)
  z = g + eps * std                            # reparameterisation

  # ---- decoder_params(z): f = MLP_f(z) --------------------------------------
  h = lrelu(dot_w(z, "wf0", L, H) + bias("bf0", H))
  h = lrelu(dot_w(h, "wf1", H, H) + bias("bf1", H))
  f = dot_w(h, "wf2", H, D) + bias("bf2", D)

  # ---- single lane-denser output slab: [f | g | v | z | lam] ----------------
  out_ref[...] = jnp.concatenate([f, g, v, z, lam], axis=1)


# ----------------------------------------------------------------------------
# Wrapper
# ----------------------------------------------------------------------------
def ivae_forward(kparams, x, u, eps, dims, slope=0.1):
  """Fused iVAE forward.  Returns the same structure as the PyTorch module."""
  w_slab, b_slab, woff, brow = kparams
  data_dim, aux_dim, latent_dim, hidden_dim = dims
  n = x.shape[0]
  H, L, D, A = hidden_dim, latent_dim, data_dim, aux_dim

  mm = lambda k, m: 2 * n * k * m
  flops = (
      mm(A, H) + mm(H, H) + mm(H, L)                              # logl
      + mm(D, 2 * H) + mm(A, 2 * H) + mm(2 * H, 2 * H)
      + 2 * mm(2 * H, L)                                          # encoder
      + mm(L, H) + mm(H, H) + mm(H, D))                           # decoder
  transcendentals = 2 * n * L                                     # lam, std
  out_width = D + 4 * L
  bytes_accessed = (int(x.nbytes) + int(u.nbytes) + int(eps.nbytes)
                    + int(w_slab.nbytes) + int(b_slab.nbytes)
                    + 4 * n * out_width)
  cost = pl.CostEstimate(flops=int(flops),
                         transcendentals=int(transcendentals),
                         bytes_accessed=int(bytes_accessed))

  out = pl.pallas_call(
      functools.partial(ivae_fused_kernel, slope=slope, dims=dims,
                        woff=woff, brow=brow),
      out_shape=jax.ShapeDtypeStruct((n, out_width), jnp.float32),
      in_specs=[_VMEM] * 5,
      out_specs=_VMEM,
      cost_estimate=cost,
  )(x, u, eps, w_slab, b_slab)

  f = out[:, :D]
  g = out[:, D:D + L]
  v = out[:, D + L:D + 2 * L]
  z = out[:, D + 2 * L:D + 3 * L]
  lam = out[:, D + 3 * L:D + 4 * L]

  decoder_var = 0.01 * jnp.ones((1,), jnp.float32)
  prior_mean = jnp.zeros((1,), jnp.float32)
  return (f, decoder_var), (g, v), z, (prior_mean, lam)


# ----------------------------------------------------------------------------
# Parameter init (mirrors nn.Linear + xavier_uniform_) and slab packing
# ----------------------------------------------------------------------------
def init_linear(key, fan_in, fan_out):
  kw, kb = jax.random.split(key)
  limit = jnp.sqrt(6.0 / (fan_in + fan_out))          # xavier uniform
  w = jax.random.uniform(kw, (fan_in, fan_out), jnp.float32, -limit, limit)
  bb = 1.0 / jnp.sqrt(fan_in)                         # torch default bias init
  b = jax.random.uniform(kb, (fan_out,), jnp.float32, -bb, bb)
  return w, b


def init_mlp3(key, in_dim, hidden_dim, out_dim):
  k0, k1, k2 = jax.random.split(key, 3)
  return (init_linear(k0, in_dim, hidden_dim),
          init_linear(k1, hidden_dim, hidden_dim),
          init_linear(k2, hidden_dim, out_dim))


def _block_diag(a, b):
  za = jnp.zeros((a.shape[0], b.shape[1]), a.dtype)
  zb = jnp.zeros((b.shape[0], a.shape[1]), b.dtype)
  return jnp.concatenate(
      [jnp.concatenate([a, za], axis=1),
       jnp.concatenate([zb, b], axis=1)], axis=0)


def _round_up(n, m):
  return ((n + m - 1) // m) * m


def prepare_kernel_params(params, dims):
  """Pack all weights into one bf16 slab and all biases into one f32 slab.

  Weight slab: each layer's (fan_in, fan_out) matrix occupies rows
  [off, off+fan_in) (off a multiple of 16) and lanes [0, fan_out) of a
  128-lane-wide slab; everything else is zero.  Bias slab: layer i's bias
  occupies row 8*i, lanes [0, fan_out).  g / logv chains are packed
  (lane-concat layer 0 split into x/u parts, block-diagonal layer 1, and the
  final layer split into [wg2;0] / [0;wv2] so both outputs are lane-aligned).
  """
  data_dim, aux_dim, latent_dim, hidden_dim = dims
  H, L, D, A = hidden_dim, latent_dim, data_dim, aux_dim

  (wl0, bl0), (wl1, bl1), (wl2, bl2) = params["logl"]
  (wg0, bg0), (wg1, bg1), (wg2, bg2) = params["g"]
  (wv0, bv0), (wv1, bv1), (wv2, bv2) = params["logv"]
  (wf0, bf0), (wf1, bf1), (wf2, bf2) = params["f"]

  we0 = jnp.concatenate([wg0, wv0], axis=1)            # (D+A, 2H)
  we0x, we0u = we0[:D], we0[D:]
  be0 = jnp.concatenate([bg0, bv0])
  we1 = _block_diag(wg1, wv1)                          # (2H, 2H)
  be1 = jnp.concatenate([bg1, bv1])
  we2g = jnp.concatenate([wg2, jnp.zeros((H, L), wg2.dtype)], axis=0)  # (2H, L)
  we2v = jnp.concatenate([jnp.zeros((H, L), wv2.dtype), wv2], axis=0)  # (2H, L)

  weights = [("wl0", wl0), ("wl1", wl1), ("wl2", wl2),
             ("we0x", we0x), ("we0u", we0u), ("we1", we1),
             ("we2g", we2g), ("we2v", we2v),
             ("wf0", wf0), ("wf1", wf1), ("wf2", wf2)]
  biases = [("bl0", bl0), ("bl1", bl1), ("bl2", bl2),
            ("be0", be0), ("be1", be1), ("bg2", bg2), ("bv2", bv2),
            ("bf0", bf0), ("bf1", bf1), ("bf2", bf2)]

  woff, blocks, rows = {}, [], 0
  for name, w in weights:
    woff[name] = rows
    pad_rows = _round_up(w.shape[0], 16)               # bf16 sublane packing
    blk = jnp.zeros((pad_rows, _LANES), jnp.float32)
    blk = blk.at[:w.shape[0], :w.shape[1]].set(w)
    blocks.append(blk)
    rows += pad_rows
  w_slab = jnp.concatenate(blocks, axis=0).astype(jnp.bfloat16)

  brow = {}
  b_slab = jnp.zeros((8 * len(biases), _LANES), jnp.float32)
  for i, (name, b) in enumerate(biases):
    brow[name] = 8 * i
    b_slab = b_slab.at[8 * i, :b.shape[0]].set(b)

  return w_slab, b_slab, woff, brow


# ----------------------------------------------------------------------------
# Pure-JAX f32 reference (module semantics) for a loose parity check.
# ----------------------------------------------------------------------------
def ivae_reference(params, x, u, eps, slope):
  def mlp(layers, h):
    (w0, b0), (w1, b1), (w2, b2) = layers
    act = lambda t: jnp.where(t >= 0, t, slope * t)
    h = act(h @ w0 + b0)
    h = act(h @ w1 + b1)
    return h @ w2 + b2
  logl = mlp(params["logl"], u)
  xu = jnp.concatenate([x, u], axis=1)
  g = mlp(params["g"], xu)
  logv = mlp(params["logv"], xu)
  v = jnp.exp(logv)
  z = g + eps * jnp.sqrt(v)
  f = mlp(params["f"], z)
  return f, g, v, z, jnp.exp(logl)


# ----------------------------------------------------------------------------
# Main
# ----------------------------------------------------------------------------
if __name__ == "__main__":
  # Small shapes consistent with the module: x (N, data_dim), u (N, aux_dim),
  # latent_dim latents, hidden_dim-wide MLPs, n_layer=3, lrelu slope 0.1.
  N, data_dim, aux_dim, latent_dim, hidden_dim = 8, 16, 8, 8, 32
  dims = (data_dim, aux_dim, latent_dim, hidden_dim)
  slope = 0.1

  key = jax.random.PRNGKey(0)
  k_logl, k_f, k_g, k_logv, k_x, k_u, k_eps = jax.random.split(key, 7)

  params = {
      "logl": init_mlp3(k_logl, aux_dim, hidden_dim, latent_dim),
      "f":    init_mlp3(k_f, latent_dim, hidden_dim, data_dim),
      "g":    init_mlp3(k_g, data_dim + aux_dim, hidden_dim, latent_dim),
      "logv": init_mlp3(k_logv, data_dim + aux_dim, hidden_dim, latent_dim),
  }
  kparams = prepare_kernel_params(params, dims)

  x = jax.random.normal(k_x, (N, data_dim), jnp.float32)
  u = jax.random.normal(k_u, (N, aux_dim), jnp.float32)
  # eps ~ N(0, 1) for the reparameterisation (encoder_dist.sample).
  eps = jax.random.normal(k_eps, (N, latent_dim), jnp.float32)

  (f_out, dec_var), (g_out, v_out), z, (prior_mu, lam) = ivae_forward(
      kparams, x, u, eps, dims, slope)
  jax.block_until_ready((f_out, dec_var, g_out, v_out, z, prior_mu, lam))

  assert f_out.shape == (N, data_dim)
  assert g_out.shape == (N, latent_dim)
  assert v_out.shape == (N, latent_dim)
  assert z.shape == (N, latent_dim)
  assert lam.shape == (N, latent_dim)
  assert bool(jnp.all(jnp.isfinite(f_out)))
  assert bool(jnp.all(v_out > 0)) and bool(jnp.all(lam > 0))
  # Internal consistency of the reparameterisation: z == g + eps * sqrt(v).
  assert bool(jnp.allclose(z, g_out + eps * jnp.sqrt(v_out),
                           rtol=1e-5, atol=1e-6))
  # Loose parity vs. full-f32 reference (bf16 matmul weights => ~1e-2 rel).
  rf, rg, rv, rz, rlam = ivae_reference(params, x, u, eps, slope)
  for got, ref in ((f_out, rf), (g_out, rg), (v_out, rv), (z, rz), (lam, rlam)):
    assert bool(jnp.allclose(got, ref, rtol=3e-2, atol=3e-2))

  print("KERNEL_OK")
</pallas_src>

<mosaic_0001>
module attributes {stable_mosaic.version = 11 : i64} {
  func.func @ivae_fused_kernel(%arg0: memref<8x16xf32, #tpu.memory_space<vmem>>, %arg1: memref<8x8xf32, #tpu.memory_space<vmem>>, %arg2: memref<8x8xf32, #tpu.memory_space<vmem>>, %arg3: memref<384x128xbf16, #tpu.memory_space<vmem>>, %arg4: memref<80x128xf32, #tpu.memory_space<vmem>>, %arg5: memref<8x48xf32, #tpu.memory_space<vmem>>) attributes {dimension_semantics = [], scalar_prefetch = 0 : i64, scratch_operands = 0 : i64, tpu.core_type = #tpu.core_type<tc>} {
    %c0 = arith.constant 0 : index
    %c0_0 = arith.constant 0 : index
    %0 = vector.load %arg0[%c0, %c0_0] : memref<8x16xf32, #tpu.memory_space<vmem>>, vector<8x16xf32>
    %c0_1 = arith.constant 0 : index
    %c0_2 = arith.constant 0 : index
    %1 = vector.load %arg1[%c0_1, %c0_2] : memref<8x8xf32, #tpu.memory_space<vmem>>, vector<8x8xf32>
    %c0_3 = arith.constant 0 : index
    %c0_4 = arith.constant 0 : index
    %2 = vector.load %arg2[%c0_3, %c0_4] : memref<8x8xf32, #tpu.memory_space<vmem>>, vector<8x8xf32>
    %c0_5 = arith.constant 0 : index
    %c0_6 = arith.constant 0 : index
    %3 = vector.load %arg3[%c0_5, %c0_6] : memref<384x128xbf16, #tpu.memory_space<vmem>>, vector<8x32xbf16>
    %4 = arith.truncf %1 : vector<8x8xf32> to vector<8x8xbf16>
    %cst = arith.constant dense<0.000000e+00> : vector<8x32xf32>
    %5 = tpu.matmul %4, %3, %cst {dimension_numbers = #tpu.dot_dimension_numbers<[1], [0], [0], [1], [0, 0, 1, 1], [], []>} : vector<8x8xbf16>, vector<8x32xbf16>, vector<8x32xf32> -> vector<8x32xf32>
    %c0_7 = arith.constant 0 : index
    %c0_8 = arith.constant 0 : index
    %6 = vector.load %arg4[%c0_7, %c0_8] : memref<80x128xf32, #tpu.memory_space<vmem>>, vector<1x32xf32>
    %7 = vector.broadcast %6 : vector<1x32xf32> to vector<8x32xf32>
    %8 = arith.addf %5, %7 : vector<8x32xf32>
    %cst_9 = arith.constant 1.000000e-01 : f32
    %9 = vector.broadcast %cst_9 : f32 to vector<8x32xf32>
    %10 = arith.mulf %9, %8 : vector<8x32xf32>
    %11 = arith.maximumf %8, %10 : vector<8x32xf32>
    %c16 = arith.constant 16 : index
    %c0_10 = arith.constant 0 : index
    %12 = vector.load %arg3[%c16, %c0_10] : memref<384x128xbf16, #tpu.memory_space<vmem>>, vector<32x32xbf16>
    %13 = arith.truncf %11 : vector<8x32xf32> to vector<8x32xbf16>
    %cst_11 = arith.constant dense<0.000000e+00> : vector<8x32xf32>
    %14 = tpu.matmul %13, %12, %cst_11 {dimension_numbers = #tpu.dot_dimension_numbers<[1], [0], [0], [1], [0, 0, 1, 1], [], []>} : vector<8x32xbf16>, vector<32x32xbf16>, vector<8x32xf32> -> vector<8x32xf32>
    %c8 = arith.constant 8 : index
    %c0_12 = arith.constant 0 : index
    %15 = vector.load %arg4[%c8, %c0_12] : memref<80x128xf32, #tpu.memory_space<vmem>>, vector<1x32xf32>
    %16 = vector.broadcast %15 : vector<1x32xf32> to vector<8x32xf32>
    %17 = arith.addf %14, %16 : vector<8x32xf32>
    %cst_13 = arith.constant 1.000000e-01 : f32
    %18 = vector.broadcast %cst_13 : f32 to vector<8x32xf32>
    %19 = arith.mulf %18, %17 : vector<8x32xf32>
    %20 = arith.maximumf %17, %19 : vector<8x32xf32>
    %c48 = arith.constant 48 : index
    %c0_14 = arith.constant 0 : index
    %21 = vector.load %arg3[%c48, %c0_14] : memref<384x128xbf16, #tpu.memory_space<vmem>>, vector<32x8xbf16>
    %22 = arith.truncf %20 : vector<8x32xf32> to vector<8x32xbf16>
    %cst_15 = arith.constant dense<0.000000e+00> : vector<8x8xf32>
    %23 = tpu.matmul %22, %21, %cst_15 {dimension_numbers = #tpu.dot_dimension_numbers<[1], [0], [0], [1], [0, 0, 1, 1], [], []>} : vector<8x32xbf16>, vector<32x8xbf16>, vector<8x8xf32> -> vector<8x8xf32>
    %c16_16 = arith.constant 16 : index
    %c0_17 = arith.constant 0 : index
    %24 = vector.load %arg4[%c16_16, %c0_17] : memref<80x128xf32, #tpu.memory_space<vmem>>, vector<1x8xf32>
    %25 = vector.broadcast %24 : vector<1x8xf32> to vector<8x8xf32>
    %26 = arith.addf %23, %25 : vector<8x8xf32>
    %27 = math.exp %26 : vector<8x8xf32>
    %c80 = arith.constant 80 : index
    %c0_18 = arith.constant 0 : index
    %28 = vector.load %arg3[%c80, %c0_18] : memref<384x128xbf16, #tpu.memory_space<vmem>>, vector<16x64xbf16>
    %29 = arith.truncf %0 : vector<8x16xf32> to vector<8x16xbf16>
    %cst_19 = arith.constant dense<0.000000e+00> : vector<8x64xf32>
    %30 = tpu.matmul %29, %28, %cst_19 {dimension_numbers = #tpu.dot_dimension_numbers<[1], [0], [0], [1], [0, 0, 1, 1], [], []>} : vector<8x16xbf16>, vector<16x64xbf16>, vector<8x64xf32> -> vector<8x64xf32>
    %c96 = arith.constant 96 : index
    %c0_20 = arith.constant 0 : index
    %31 = vector.load %arg3[%c96, %c0_20] : memref<384x128xbf16, #tpu.memory_space<vmem>>, vector<8x64xbf16>
    %32 = arith.truncf %1 : vector<8x8xf32> to vector<8x8xbf16>
    %cst_21 = arith.constant dense<0.000000e+00> : vector<8x64xf32>
    %33 = tpu.matmul %32, %31, %cst_21 {dimension_numbers = #tpu.dot_dimension_numbers<[1], [0], [0], [1], [0, 0, 1, 1], [], []>} : vector<8x8xbf16>, vector<8x64xbf16>, vector<8x64xf32> -> vector<8x64xf32>
    %34 = arith.addf %30, %33 : vector<8x64xf32>
    %c24 = arith.constant 24 : index
    %c0_22 = arith.constant 0 : index
    %35 = vector.load %arg4[%c24, %c0_22] : memref<80x128xf32, #tpu.memory_space<vmem>>, vector<1x64xf32>
    %36 = vector.broadcast %35 : vector<1x64xf32> to vector<8x64xf32>
    %37 = arith.addf %34, %36 : vector<8x64xf32>
    %cst_23 = arith.constant 1.000000e-01 : f32
    %38 = vector.broadcast %cst_23 : f32 to vector<8x64xf32>
    %39 = arith.mulf %38, %37 : vector<8x64xf32>
    %40 = arith.maximumf %37, %39 : vector<8x64xf32>
    %c112 = arith.constant 112 : index
    %c0_24 = arith.constant 0 : index
    %41 = vector.load %arg3[%c112, %c0_24] : memref<384x128xbf16, #tpu.memory_space<vmem>>, vector<64x64xbf16>
    %42 = arith.truncf %40 : vector<8x64xf32> to vector<8x64xbf16>
    %cst_25 = arith.constant dense<0.000000e+00> : vector<8x64xf32>
    %43 = tpu.matmul %42, %41, %cst_25 {dimension_numbers = #tpu.dot_dimension_numbers<[1], [0], [0], [1], [0, 0, 1, 1], [], []>} : vector<8x64xbf16>, vector<64x64xbf16>, vector<8x64xf32> -> vector<8x64xf32>
    %c32 = arith.constant 32 : index
    %c0_26 = arith.constant 0 : index
    %44 = vector.load %arg4[%c32, %c0_26] : memref<80x128xf32, #tpu.memory_space<vmem>>, vector<1x64xf32>
    %45 = vector.broadcast %44 : vector<1x64xf32> to vector<8x64xf32>
    %46 = arith.addf %43, %45 : vector<8x64xf32>
    %cst_27 = arith.constant 1.000000e-01 : f32
    %47 = vector.broadcast %cst_27 : f32 to vector<8x64xf32>
    %48 = arith.mulf %47, %46 : vector<8x64xf32>
    %49 = arith.maximumf %46, %48 : vector<8x64xf32>
    %c176 = arith.constant 176 : index
    %c0_28 = arith.constant 0 : index
    %50 = vector.load %arg3[%c176, %c0_28] : memref<384x128xbf16, #tpu.memory_space<vmem>>, vector<64x8xbf16>
    %51 = arith.truncf %49 : vector<8x64xf32> to vector<8x64xbf16>
    %cst_29 = arith.constant dense<0.000000e+00> : vector<8x8xf32>
    %52 = tpu.matmul %51, %50, %cst_29 {dimension_numbers = #tpu.dot_dimension_numbers<[1], [0], [0], [1], [0, 0, 1, 1], [], []>} : vector<8x64xbf16>, vector<64x8xbf16>, vector<8x8xf32> -> vector<8x8xf32>
    %c40 = arith.constant 40 : index
    %c0_30 = arith.constant 0 : index
    %53 = vector.load %arg4[%c40, %c0_30] : memref<80x128xf32, #tpu.memory_space<vmem>>, vector<1x8xf32>
    %54 = vector.broadcast %53 : vector<1x8xf32> to vector<8x8xf32>
    %55 = arith.addf %52, %54 : vector<8x8xf32>
    %c240 = arith.constant 240 : index
    %c0_31 = arith.constant 0 : index
    %56 = vector.load %arg3[%c240, %c0_31] : memref<384x128xbf16, #tpu.memory_space<vmem>>, vector<64x8xbf16>
    %57 = arith.truncf %49 : vector<8x64xf32> to vector<8x64xbf16>
    %cst_32 = arith.constant dense<0.000000e+00> : vector<8x8xf32>
    %58 = tpu.matmul %57, %56, %cst_32 {dimension_numbers = #tpu.dot_dimension_numbers<[1], [0], [0], [1], [0, 0, 1, 1], [], []>} : vector<8x64xbf16>, vector<64x8xbf16>, vector<8x8xf32> -> vector<8x8xf32>
    %c48_33 = arith.constant 48 : index
    %c0_34 = arith.constant 0 : index
    %59 = vector.load %arg4[%c48_33, %c0_34] : memref<80x128xf32, #tpu.memory_space<vmem>>, vector<1x8xf32>
    %60 = vector.broadcast %59 : vector<1x8xf32> to vector<8x8xf32>
    %61 = arith.addf %58, %60 : vector<8x8xf32>
    %cst_35 = arith.constant 5.000000e-01 : f32
    %62 = vector.broadcast %cst_35 : f32 to vector<8x8xf32>
    %63 = arith.mulf %62, %61 : vector<8x8xf32>
    %64 = math.exp %63 : vector<8x8xf32>
    %65 = arith.mulf %64, %64 : vector<8x8xf32>
    %66 = arith.mulf %2, %64 : vector<8x8xf32>
    %67 = arith.addf %55, %66 : vector<8x8xf32>
    %c304 = arith.constant 304 : index
    %c0_36 = arith.constant 0 : index
    %68 = vector.load %arg3[%c304, %c0_36] : memref<384x128xbf16, #tpu.memory_space<vmem>>, vector<8x32xbf16>
    %69 = arith.truncf %67 : vector<8x8xf32> to vector<8x8xbf16>
    %cst_37 = arith.constant dense<0.000000e+00> : vector<8x32xf32>
    %70 = tpu.matmul %69, %68, %cst_37 {dimension_numbers = #tpu.dot_dimension_numbers<[1], [0], [0], [1], [0, 0, 1, 1], [], []>} : vector<8x8xbf16>, vector<8x32xbf16>, vector<8x32xf32> -> vector<8x32xf32>
    %c56 = arith.constant 56 : index
    %c0_38 = arith.constant 0 : index
    %71 = vector.load %arg4[%c56, %c0_38] : memref<80x128xf32, #tpu.memory_space<vmem>>, vector<1x32xf32>
    %72 = vector.broadcast %71 : vector<1x32xf32> to vector<8x32xf32>
    %73 = arith.addf %70, %72 : vector<8x32xf32>
    %cst_39 = arith.constant 1.000000e-01 : f32
    %74 = vector.broadcast %cst_39 : f32 to vector<8x32xf32>
    %75 = arith.mulf %74, %73 : vector<8x32xf32>
    %76 = arith.maximumf %73, %75 : vector<8x32xf32>
    %c320 = arith.constant 320 : index
    %c0_40 = arith.constant 0 : index
    %77 = vector.load %arg3[%c320, %c0_40] : memref<384x128xbf16, #tpu.memory_space<vmem>>, vector<32x32xbf16>
    %78 = arith.truncf %76 : vector<8x32xf32> to vector<8x32xbf16>
    %cst_41 = arith.constant dense<0.000000e+00> : vector<8x32xf32>
    %79 = tpu.matmul %78, %77, %cst_41 {dimension_numbers = #tpu.dot_dimension_numbers<[1], [0], [0], [1], [0, 0, 1, 1], [], []>} : vector<8x32xbf16>, vector<32x32xbf16>, vector<8x32xf32> -> vector<8x32xf32>
    %c64 = arith.constant 64 : index
    %c0_42 = arith.constant 0 : index
    %80 = vector.load %arg4[%c64, %c0_42] : memref<80x128xf32, #tpu.memory_space<vmem>>, vector<1x32xf32>
    %81 = vector.broadcast %80 : vector<1x32xf32> to vector<8x32xf32>
    %82 = arith.addf %79, %81 : vector<8x32xf32>
    %cst_43 = arith.constant 1.000000e-01 : f32
    %83 = vector.broadcast %cst_43 : f32 to vector<8x32xf32>
    %84 = arith.mulf %83, %82 : vector<8x32xf32>
    %85 = arith.maximumf %82, %84 : vector<8x32xf32>
    %c352 = arith.constant 352 : index
    %c0_44 = arith.constant 0 : index
    %86 = vector.load %arg3[%c352, %c0_44] : memref<384x128xbf16, #tpu.memory_space<vmem>>, vector<32x16xbf16>
    %87 = arith.truncf %85 : vector<8x32xf32> to vector<8x32xbf16>
    %cst_45 = arith.constant dense<0.000000e+00> : vector<8x16xf32>
    %88 = tpu.matmul %87, %86, %cst_45 {dimension_numbers = #tpu.dot_dimension_numbers<[1], [0], [0], [1], [0, 0, 1, 1], [], []>} : vector<8x32xbf16>, vector<32x16xbf16>, vector<8x16xf32> -> vector<8x16xf32>
    %c72 = arith.constant 72 : index
    %c0_46 = arith.constant 0 : index
    %89 = vector.load %arg4[%c72, %c0_46] : memref<80x128xf32, #tpu.memory_space<vmem>>, vector<1x16xf32>
    %90 = vector.broadcast %89 : vector<1x16xf32> to vector<8x16xf32>
    %91 = arith.addf %88, %90 : vector<8x16xf32>
    %92 = tpu.concatenate %91, %55, %65, %67, %27 in 1 : vector<8x16xf32>, vector<8x8xf32>, vector<8x8xf32>, vector<8x8xf32>, vector<8x8xf32> -> vector<8x48xf32>
    %c0_47 = arith.constant 0 : index
    %c0_48 = arith.constant 0 : index
    %93 = vector.load %arg5[%c0_47, %c0_48] : memref<8x48xf32, #tpu.memory_space<vmem>>, vector<8x48xf32>
    tpu.vector_store %arg5[%c0_47, %c0_48], %92 {strides = array<i32>} : memref<8x48xf32, #tpu.memory_space<vmem>>, vector<8x48xf32>,
    return
  }
}

</mosaic_0001>

<llo_original>
// kernel: tpu_custom_call.1
$region0: #{tpu_custom_call.1}
  #allocation0 [shape = 'u32[]', space=smem, size = 0x4, offset = 0x4, fixed_abs, tag = 'smem constant byte address 0x4 - core index']
  #allocation1 [shape = 'u32[144,128]{1,0:T(1,128)}', space=vmem, size = 0x12000, scoped, tag = 'internal scratch']
  %s0 = inlined_call_operand.hbm [shape: f32[8,16], index: 0, kind: input, shape index: {}]
  %s1 = inlined_call_operand.hbm [shape: f32[8,8], index: 1, kind: input, shape index: {}]
  %s2 = inlined_call_operand.hbm [shape: f32[8,8], index: 2, kind: input, shape index: {}]
  %s3 = inlined_call_operand.hbm [shape: bf16[384,128], index: 3, kind: input, shape index: {}]
  %s4 = inlined_call_operand.hbm [shape: f32[80,128], index: 4, kind: input, shape index: {}]
  %s5 = inlined_call_operand.hbm [shape: f32[8,48], index: 5, kind: output, shape index: {}]
  %s6 = sld [smem:[#allocation0]]
  $region50: #{tpu_custom_call.1} parent=0
    _
  %s8 = ssub.s32 1, %s6
  %s9 = scalar_select 0, %s8, %s6
  $region1: #{tpu_custom_call.1} parent=0
    #allocation2 [shape = 'u8[4096]{0}', space=vmem, size = 0x1000, scoped, tag = 'input window, operand 0, single buffered']
    #allocation3 [shape = 's32[1]{0}', space=sflag, size = 0x4, scoped, tag = 'scoped memory for tpu_custom_call.1']
    #allocation4 [shape = 's32[1]{0}', space=sflag, size = 0x4, scoped, tag = 'scoped memory for tpu_custom_call.1']
    #allocation5 [shape = 'u8[4096]{0}', space=vmem, size = 0x1000, scoped, tag = 'input window, operand 1, single buffered']
    #allocation6 [shape = 's32[1]{0}', space=sflag, size = 0x4, scoped, tag = 'scoped memory for tpu_custom_call.1']
    #allocation7 [shape = 'u8[4096]{0}', space=vmem, size = 0x1000, scoped, tag = 'input window, operand 2, single buffered']
    #allocation8 [shape = 'u8[98304]{0}', space=vmem, size = 0x18000, scoped, tag = 'input window, operand 3, single buffered']
    #allocation9 [shape = 's32[1]{0}', space=sflag, size = 0x4, scoped, tag = 'scoped memory for tpu_custom_call.1']
    #allocation10 [shape = 'u8[40960]{0}', space=vmem, size = 0xa000, scoped, tag = 'input window, operand 4, single buffered']
    #allocation11 [shape = 'u8[4096]{0}', space=vmem, size = 0x1000, scoped, tag = 'output window, operand 0, single buffered']
    %10 = vsyncpa [#allocation3], 0
    %11 = vsyncpa [#allocation6], 0
    %12 = vsyncpa [#allocation9], 0
    %13 = vsyncpa [#allocation4], 0
    // Predicated region
    $region2: #{tpu_custom_call.1} parent=1 // pred_check
      _
    $region3: #{tpu_custom_call.1} parent=1 // pred_check_branch
      %15 = sbr.rel (0) target = $region5
    $region4: #{tpu_custom_call.1} parent=1 // pred_region
      %s17 = ssub.s32 128, 128
      %18 = vsyncadd [#allocation3], %s17
      %s20 = sshll.u32 [#allocation2], 4
      %s21 = int_to_ptr.vmem [resolvable:$true] %s20
      %23 = dma.hbm_to_vmem [thread:$0]  %s0, 128, %s21, [#allocation3]
    $region5: #{tpu_custom_call.1} parent=1 // pred_fallthru
      _
    // Predicated region
    $region6: #{tpu_custom_call.1} parent=1 // pred_check
      _
    $region7: #{tpu_custom_call.1} parent=1 // pred_check_branch
      %25 = sbr.rel (0) target = $region9
    $region8: #{tpu_custom_call.1} parent=1 // pred_region
      %s27 = ssub.s32 128, 128
      %28 = vsyncadd [#allocation6], %s27
      %s30 = sshll.u32 [#allocation5], 4
      %s31 = int_to_ptr.vmem [resolvable:$true] %s30
      %33 = dma.hbm_to_vmem [thread:$0]  %s1, 128, %s31, [#allocation6]
    $region9: #{tpu_custom_call.1} parent=1 // pred_fallthru
      _
    // Predicated region
    $region10: #{tpu_custom_call.1} parent=1 // pred_check
      _
    $region11: #{tpu_custom_call.1} parent=1 // pred_check_branch
      %35 = sbr.rel (0) target = $region13
    $region12: #{tpu_custom_call.1} parent=1 // pred_region
      %s37 = ssub.s32 128, 128
      %38 = vsyncadd [#allocation6], %s37
      %s40 = sshll.u32 [#allocation7], 4
      %s41 = int_to_ptr.vmem [resolvable:$true] %s40
      %43 = dma.hbm_to_vmem [thread:$0]  %s2, 128, %s41, [#allocation6]
    $region13: #{tpu_custom_call.1} parent=1 // pred_fallthru
      _
    // Predicated region
    $region14: #{tpu_custom_call.1} parent=1 // pred_check
      _
    $region15: #{tpu_custom_call.1} parent=1 // pred_check_branch
      %45 = sbr.rel (0) target = $region17
    $region16: #{tpu_custom_call.1} parent=1 // pred_region
      %s47 = ssub.s32 3072, 3072
      %48 = vsyncadd [#allocation9], %s47
      %s49 = sshll.u32 [#allocation8], 4
      %s50 = int_to_ptr.vmem [resolvable:$true] %s49
      %55 = dma.hbm_to_vmem [thread:$0]  %s3, 3072, %s50, [#allocation9], 64, 64, 4
    $region17: #{tpu_custom_call.1} parent=1 // pred_fallthru
      _
    // Predicated region
    $region18: #{tpu_custom_call.1} parent=1 // pred_check
      _
    $region19: #{tpu_custom_call.1} parent=1 // pred_check_branch
      %57 = sbr.rel (0) target = $region21
    $region20: #{tpu_custom_call.1} parent=1 // pred_region
      %s59 = ssub.s32 1280, 1280
      %60 = vsyncadd [#allocation9], %s59
      %s61 = sshll.u32 [#allocation10], 4
      %s62 = int_to_ptr.vmem [resolvable:$true] %s61
      %67 = dma.hbm_to_vmem [thread:$0]  %s4, 1280, %s62, [#allocation9], 128, 128, 8
    $region21: #{tpu_custom_call.1} parent=1 // pred_fallthru
      _
    // Predicated region
    $region22: #{tpu_custom_call.1} parent=1 // pred_check
      _
    $region23: #{tpu_custom_call.1} parent=1 // pred_check_branch
      %69 = sbr.rel (0) target = $region25
    $region24: #{tpu_custom_call.1} parent=1 // pred_region
      %70 = dma.done [#allocation3], 128
    $region25: #{tpu_custom_call.1} parent=1 // pred_fallthru
      _
    // Predicated region
    $region26: #{tpu_custom_call.1} parent=1 // pred_check
      _
    $region27: #{tpu_custom_call.1} parent=1 // pred_check_branch
      %72 = sbr.rel (0) target = $region29
    $region28: #{tpu_custom_call.1} parent=1 // pred_region
      %73 = dma.done [#allocation6], 128
    $region29: #{tpu_custom_call.1} parent=1 // pred_fallthru
      _
    // Predicated region
    $region30: #{tpu_custom_call.1} parent=1 // pred_check
      _
    $region31: #{tpu_custom_call.1} parent=1 // pred_check_branch
      %75 = sbr.rel (0) target = $region33
    $region32: #{tpu_custom_call.1} parent=1 // pred_region
      %76 = dma.done [#allocation6], 128
    $region33: #{tpu_custom_call.1} parent=1 // pred_fallthru
      _
    // Predicated region
    $region34: #{tpu_custom_call.1} parent=1 // pred_check
      _
    $region35: #{tpu_custom_call.1} parent=1 // pred_check_branch
      %78 = sbr.rel (0) target = $region37
    $region36: #{tpu_custom_call.1} parent=1 // pred_region
      %79 = dma.done [#allocation9], 3072
    $region37: #{tpu_custom_call.1} parent=1 // pred_fallthru
      _
    // Predicated region
    $region38: #{tpu_custom_call.1} parent=1 // pred_check
      _
    $region39: #{tpu_custom_call.1} parent=1 // pred_check_branch
      %81 = sbr.rel (0) target = $region41
    $region40: #{tpu_custom_call.1} parent=1 // pred_region
      %82 = dma.done [#allocation9], 1280
    $region41: #{tpu_custom_call.1} parent=1 // pred_fallthru
      _
    %v84 = vld [vmem:[#allocation2] sm:$0xff]
    %v85 = vld [vmem:[#allocation5] sm:$0xff]
    %v86 = vld [vmem:[#allocation7] sm:$0xff]
    %v87 = vld [vmem:[#allocation8] sm:$0xf]
    %v88 = vpack.c.bf16 %v85, %v85
    %v89 = vld [vmem:[#allocation10] sm:$0x1]
    %v90 = vlaneseq
    %v91 = vshrl.u32 %v90, 7
    %v92 = vsub.s32 0, %v91
    %v93 = vrot.slane %v89, %v92
    %vm94 = vcmask 64512
    %v96 = vsel %vm94, %v88, 0
    %vm98 = vcmask 1043456
    %v100 = vsel %vm98, %v87, 0
    %102 = vmatprep.subr.bf16.mxu0 0
    %103 = vmatpush1.bf16.msra.mxu0 %v100
    %104 = vmatprep.subr.bf16.mxu0 0
    %105 = vmatpush1.bf16.msra.mxu0 0
    %106 = vmatprep.subr.bf16.mxu0 0
    %107 = vmatpush1.bf16.msra.mxu0 0
    %108 = vmatprep.subr.bf16.mxu0 0
    %109 = vmatpush1.bf16.msra.mxu0 0
    %110 = vmatprep.subr.bf16.mxu0 0
    %111 = vmatpush1.bf16.msra.mxu0 0
    %112 = vmatprep.subr.bf16.mxu0 0
    %113 = vmatpush1.bf16.msra.mxu0 0
    %114 = vmatprep.subr.bf16.mxu0 0
    %115 = vmatpush1.bf16.msra.mxu0 0
    %116 = vmatprep.subr.bf16.mxu0 0
    %117 = vmatpush1.bf16.msra.mxu0 0
    %118 = vmatprep.subr.bf16.mxu0 0
    %119 = vmatpush1.bf16.msra.mxu0 0
    %120 = vmatprep.subr.bf16.mxu0 0
    %121 = vmatpush1.bf16.msra.mxu0 0
    %122 = vmatprep.subr.bf16.mxu0 0
    %123 = vmatpush1.bf16.msra.mxu0 0
    %124 = vmatprep.subr.bf16.mxu0 0
    %125 = vmatpush1.bf16.msra.mxu0 0
    %126 = vmatprep.subr.bf16.mxu0 0
    %127 = vmatpush1.bf16.msra.mxu0 0
    %128 = vmatprep.subr.bf16.mxu0 0
    %129 = vmatpush1.bf16.msra.mxu0 0
    %130 = vmatprep.subr.bf16.mxu0 0
    %131 = vmatpush1.bf16.msra.mxu0 0
    %132 = vmatprep.subr.bf16.mxu0 0
    %133 = vmatpush1.bf16.msra.mxu0 0
    %134 = vmatprep.mubr.bf16.mxu0 0
    %135 = vmatmul.mubr.bf16.gmra.mrb[0].mxu0 %v96
    %v136 = vpop.f32.mrb[0].mxu0
    %v137 = vadd.f32 %v93, %v136
    %v138 = vpop.f32.mrb[0].mxu0
    %v139 = vpop.f32.mrb[0].mxu0
    %v140 = vpop.f32.mrb[0].mxu0
    %141 = vdwg.mxu0
    %v142 = vmul.f32 %v137, 0.1
    %v143 = vmax.f32 %v137, %v142
    %v144 = vld [vmem:[#allocation8 + $0x8] sm:$0xf]
    %v145 = vld [vmem:[#allocation8 + $0xc] sm:$0xf]
    %v146 = vld [vmem:[#allocation8 + $0x10] sm:$0xf]
    %v147 = vld [vmem:[#allocation8 + $0x14] sm:$0xf]
    %v148 = vpack.c.bf16 %v143, %v143
    %v149 = vld [vmem:[#allocation10 + $0x8] sm:$0x1]
    %v150 = vlaneseq
    %v151 = vshrl.u32 %v150, 7
    %v152 = vsub.s32 0, %v151
    %v153 = vrot.slane %v149, %v152
    %v158 = vunpack.c.l.b16 %v144
    %v159 = vunpack.c.l.b16 %v145
    %v160 = vunpack.c.l.b16 %v146
    %v161 = vunpack.c.l.b16 %v147
    %v162 = vpack.c.b16 %v159, %v158
    %v163 = vpack.c.b16 %v161, %v160
    %vm166 = vcmask 261120
    %v168 = vsel %vm166, %v148, 0
    %170 = vmatprep.subr.bf16.mxu0 0
    %171 = vmatpush1.bf16.msra.mxu0 %v162
    %172 = vmatprep.subr.bf16.mxu0 0
    %173 = vmatpush1.bf16.msra.mxu0 %v163
    %174 = vmatprep.subr.bf16.mxu0 0
    %175 = vmatpush1.bf16.msra.mxu0 0
    %176 = vmatprep.subr.bf16.mxu0 0
    %177 = vmatpush1.bf16.msra.mxu0 0
    %178 = vmatprep.subr.bf16.mxu0 0
    %179 = vmatpush1.bf16.msra.mxu0 0
    %180 = vmatprep.subr.bf16.mxu0 0
    %181 = vmatpush1.bf16.msra.mxu0 0
    %182 = vmatprep.subr.bf16.mxu0 0
    %183 = vmatpush1.bf16.msra.mxu0 0
    %184 = vmatprep.subr.bf16.mxu0 0
    %185 = vmatpush1.bf16.msra.mxu0 0
    %186 = vmatprep.subr.bf16.mxu0 0
    %187 = vmatpush1.bf16.msra.mxu0 0
    %188 = vmatprep.subr.bf16.mxu0 0
    %189 = vmatpush1.bf16.msra.mxu0 0
    %190 = vmatprep.subr.bf16.mxu0 0
    %191 = vmatpush1.bf16.msra.mxu0 0
    %192 = vmatprep.subr.bf16.mxu0 0
    %193 = vmatpush1.bf16.msra.mxu0 0
    %194 = vmatprep.subr.bf16.mxu0 0
    %195 = vmatpush1.bf16.msra.mxu0 0
    %196 = vmatprep.subr.bf16.mxu0 0
    %197 = vmatpush1.bf16.msra.mxu0 0
    %198 = vmatprep.subr.bf16.mxu0 0
    %199 = vmatpush1.bf16.msra.mxu0 0
    %200 = vmatprep.subr.bf16.mxu0 0
    %201 = vmatpush1.bf16.msra.mxu0 0
    %202 = vmatprep.mubr.bf16.mxu0 0
    %203 = vmatmul.mubr.bf16.gmra.mrb[0].mxu0 %v168
    %v204 = vpop.f32.mrb[0].mxu0
    %v205 = vadd.f32 %v153, %v204
    %v206 = vpop.f32.mrb[0].mxu0
    %v207 = vpop.f32.mrb[0].mxu0
    %v208 = vpop.f32.mrb[0].mxu0
    %209 = vdwg.mxu0
    %v210 = vmul.f32 %v205, 0.1
    %v211 = vmax.f32 %v205, %v210
    %v212 = vld [vmem:[#allocation8 + $0x18] sm:$0xf]
    %v213 = vld [vmem:[#allocation8 + $0x1c] sm:$0xf]
    %v214 = vld [vmem:[#allocation8 + $0x20] sm:$0xf]
    %v215 = vld [vmem:[#allocation8 + $0x24] sm:$0xf]
    %v216 = vpack.c.bf16 %v211, %v211
    %v217 = vld [vmem:[#allocation10 + $0x10] sm:$0x1]
    %v218 = vlaneseq
    %v219 = vshrl.u32 %v218, 7
    %v220 = vsub.s32 0, %v219
    %v221 = vrot.slane %v217, %v220
    %v226 = vunpack.c.l.b16 %v212
    %v227 = vunpack.c.l.b16 %v213
    %v228 = vunpack.c.l.b16 %v214
    %v229 = vunpack.c.l.b16 %v215
    %v230 = vpack.c.b16 %v227, %v226
    %v231 = vpack.c.b16 %v229, %v228
    %v235 = vsel %vm166, %v216, 0
    %237 = vmatprep.subr.bf16.mxu0 0
    %238 = vmatpush1.bf16.msra.mxu0 %v230
    %239 = vmatprep.subr.bf16.mxu0 0
    %240 = vmatpush1.bf16.msra.mxu0 %v231
    %241 = vmatprep.subr.bf16.mxu0 0
    %242 = vmatpush1.bf16.msra.mxu0 0
    %243 = vmatprep.subr.bf16.mxu0 0
    %244 = vmatpush1.bf16.msra.mxu0 0
    %245 = vmatprep.subr.bf16.mxu0 0
    %246 = vmatpush1.bf16.msra.mxu0 0
    %247 = vmatprep.subr.bf16.mxu0 0
    %248 = vmatpush1.bf16.msra.mxu0 0
    %249 = vmatprep.subr.bf16.mxu0 0
    %250 = vmatpush1.bf16.msra.mxu0 0
    %251 = vmatprep.subr.bf16.mxu0 0
    %252 = vmatpush1.bf16.msra.mxu0 0
    %253 = vmatprep.subr.bf16.mxu0 0
    %254 = vmatpush1.bf16.msra.mxu0 0
    %255 = vmatprep.subr.bf16.mxu0 0
    %256 = vmatpush1.bf16.msra.mxu0 0
    %257 = vmatprep.subr.bf16.mxu0 0
    %258 = vmatpush1.bf16.msra.mxu0 0
    %259 = vmatprep.subr.bf16.mxu0 0
    %260 = vmatpush1.bf16.msra.mxu0 0
    %261 = vmatprep.subr.bf16.mxu0 0
    %262 = vmatpush1.bf16.msra.mxu0 0
    %263 = vmatprep.subr.bf16.mxu0 0
    %264 = vmatpush1.bf16.msra.mxu0 0
    %265 = vmatprep.subr.bf16.mxu0 0
    %266 = vmatpush1.bf16.msra.mxu0 0
    %267 = vmatprep.subr.bf16.mxu0 0
    %268 = vmatpush1.bf16.msra.mxu0 0
    %269 = vmatprep.mubr.bf16.mxu0 0
    %270 = vmatmul.mubr.bf16.gmra.mrb[0].mxu0 %v235
    %v271 = vpop.f32.mrb[0].mxu0
    %v272 = vadd.f32 %v221, %v271
    %v273 = vpop.f32.mrb[0].mxu0
    %v274 = vpop.f32.mrb[0].mxu0
    %v275 = vpop.f32.mrb[0].mxu0
    %276 = vdwg.mxu0
    %v277 = vmul.f32 %v272, 1.442695
    %v278 = vpow.pop %v277
    %v279 = vld [vmem:[#allocation8 + $0x28] sm:$0xf]
    %v280 = vld [vmem:[#allocation8 + $0x2c] sm:$0xf]
    %v281 = vpack.c.bf16 %v84, %v84
    %v282 = vld [vmem:[#allocation8 + $0x30] sm:$0xf]
    %v284 = vsel %vm98, %v282, 0
    %286 = vmatprep.subr.bf16.mxu0 0
    %287 = vmatpush1.bf16.msra.mxu0 %v284
    %288 = vmatprep.subr.bf16.mxu0 0
    %289 = vmatpush1.bf16.msra.mxu0 0
    %290 = vmatprep.subr.bf16.mxu0 0
    %291 = vmatpush1.bf16.msra.mxu0 0
    %292 = vmatprep.subr.bf16.mxu0 0
    %293 = vmatpush1.bf16.msra.mxu0 0
    %294 = vmatprep.subr.bf16.mxu0 0
    %295 = vmatpush1.bf16.msra.mxu0 0
    %296 = vmatprep.subr.bf16.mxu0 0
    %297 = vmatpush1.bf16.msra.mxu0 0
    %298 = vmatprep.subr.bf16.mxu0 0
    %299 = vmatpush1.bf16.msra.mxu0 0
    %300 = vmatprep.subr.bf16.mxu0 0
    %301 = vmatpush1.bf16.msra.mxu0 0
    %302 = vmatprep.subr.bf16.mxu0 0
    %303 = vmatpush1.bf16.msra.mxu0 0
    %304 = vmatprep.subr.bf16.mxu0 0
    %305 = vmatpush1.bf16.msra.mxu0 0
    %306 = vmatprep.subr.bf16.mxu0 0
    %307 = vmatpush1.bf16.msra.mxu0 0
    %308 = vmatprep.subr.bf16.mxu0 0
    %309 = vmatpush1.bf16.msra.mxu0 0
    %310 = vmatprep.subr.bf16.mxu0 0
    %311 = vmatpush1.bf16.msra.mxu0 0
    %312 = vmatprep.subr.bf16.mxu0 0
    %313 = vmatpush1.bf16.msra.mxu0 0
    %314 = vmatprep.subr.bf16.mxu0 0
    %315 = vmatpush1.bf16.msra.mxu0 0
    %316 = vmatprep.subr.bf16.mxu0 0
    %317 = vmatpush1.bf16.msra.mxu0 0
    %318 = vmatprep.mubr.bf16.mxu0 0
    %319 = vmatmul.mubr.bf16.gmra.mrb[0].mxu0 %v96
    %v320 = vpop.f32.mrb[0].mxu0
    %v321 = vadd.f32 0.0, %v320
    %v322 = vpop.f32.mrb[0].mxu0
    %v323 = vpop.f32.mrb[0].mxu0
    %v324 = vpop.f32.mrb[0].mxu0
    %325 = vdwg.mxu0
    %v328 = vunpack.c.l.b16 %v279
    %v329 = vunpack.c.l.b16 %v280
    %v330 = vpack.c.b16 %v329, %v328
    %vm332 = vcmask 130048
    %v334 = vsel %vm332, %v281, 0
    %336 = vmatprep.subr.bf16.mxu0 0
    %337 = vmatpush1.bf16.msra.mxu0 %v330
    %338 = vmatprep.subr.bf16.mxu0 0
    %339 = vmatpush1.bf16.msra.mxu0 0
    %340 = vmatprep.subr.bf16.mxu0 0
    %341 = vmatpush1.bf16.msra.mxu0 0
    %342 = vmatprep.subr.bf16.mxu0 0
    %343 = vmatpush1.bf16.msra.mxu0 0
    %344 = vmatprep.subr.bf16.mxu0 0
    %345 = vmatpush1.bf16.msra.mxu0 0
    %346 = vmatprep.subr.bf16.mxu0 0
    %347 = vmatpush1.bf16.msra.mxu0 0
    %348 = vmatprep.subr.bf16.mxu0 0
    %349 = vmatpush1.bf16.msra.mxu0 0
    %350 = vmatprep.subr.bf16.mxu0 0
    %351 = vmatpush1.bf16.msra.mxu0 0
    %352 = vmatprep.subr.bf16.mxu0 0
    %353 = vmatpush1.bf16.msra.mxu0 0
    %354 = vmatprep.subr.bf16.mxu0 0
    %355 = vmatpush1.bf16.msra.mxu0 0
    %356 = vmatprep.subr.bf16.mxu0 0
    %357 = vmatpush1.bf16.msra.mxu0 0
    %358 = vmatprep.subr.bf16.mxu0 0
    %359 = vmatpush1.bf16.msra.mxu0 0
    %360 = vmatprep.subr.bf16.mxu0 0
    %361 = vmatpush1.bf16.msra.mxu0 0
    %362 = vmatprep.subr.bf16.mxu0 0
    %363 = vmatpush1.bf16.msra.mxu0 0
    %364 = vmatprep.subr.bf16.mxu0 0
    %365 = vmatpush1.bf16.msra.mxu0 0
    %366 = vmatprep.subr.bf16.mxu0 0
    %367 = vmatpush1.bf16.msra.mxu0 0
    %368 = vmatprep.mubr.bf16.mxu0 0
    %369 = vmatmul.mubr.bf16.gmra.mrb[0].mxu0 %v334
    %v370 = vpop.f32.mrb[0].mxu0
    %v371 = vadd.f32 %v321, %v370
    %v372 = vpop.f32.mrb[0].mxu0
    %v373 = vpop.f32.mrb[0].mxu0
    %v374 = vpop.f32.mrb[0].mxu0
    %375 = vdwg.mxu0
    %v376 = vld [vmem:[#allocation10 + $0x18] sm:$0x1]
    %v377 = vlaneseq
    %v378 = vshrl.u32 %v377, 7
    %v379 = vsub.s32 0, %v378
    %v380 = vrot.slane %v376, %v379
    %v381 = vadd.f32 %v371, %v380
    %v382 = vmul.f32 %v381, 0.1
    %v383 = vmax.f32 %v381, %v382
    %v384 = vld [vmem:[#allocation8 + $0x38] sm:$0xf]
    %v385 = vld [vmem:[#allocation8 + $0x3c] sm:$0xf]
    %v386 = vld [vmem:[#allocation8 + $0x40] sm:$0xf]
    %v387 = vld [vmem:[#allocation8 + $0x44] sm:$0xf]
    %v388 = vld [vmem:[#allocation8 + $0x48] sm:$0xf]
    %v389 = vld [vmem:[#allocation8 + $0x4c] sm:$0xf]
    %v390 = vld [vmem:[#allocation8 + $0x50] sm:$0xf]
    %v391 = vld [vmem:[#allocation8 + $0x54] sm:$0xf]
    %v392 = vpack.c.bf16 %v383, %v383
    %v393 = vld [vmem:[#allocation10 + $0x20] sm:$0x1]
    %v394 = vlaneseq
    %v395 = vshrl.u32 %v394, 7
    %v396 = vsub.s32 0, %v395
    %v397 = vrot.slane %v393, %v396
    %v406 = vunpack.c.l.b16 %v384
    %v407 = vunpack.c.l.b16 %v385
    %v408 = vunpack.c.l.b16 %v386
    %v409 = vunpack.c.l.b16 %v387
    %v410 = vunpack.c.l.b16 %v388
    %v411 = vunpack.c.l.b16 %v389
    %v412 = vunpack.c.l.b16 %v390
    %v413 = vunpack.c.l.b16 %v391
    %v414 = vpack.c.b16 %v407, %v406
    %v415 = vpack.c.b16 %v409, %v408
    %v416 = vpack.c.b16 %v411, %v410
    %v417 = vpack.c.b16 %v413, %v412
    %vm422 = vcmask 523264
    %v424 = vsel %vm422, %v392, 0
    %426 = vmatprep.subr.bf16.mxu0 0
    %427 = vmatpush1.bf16.msra.mxu0 %v414
    %428 = vmatprep.subr.bf16.mxu0 0
    %429 = vmatpush1.bf16.msra.mxu0 %v415
    %430 = vmatprep.subr.bf16.mxu0 0
    %431 = vmatpush1.bf16.msra.mxu0 %v416
    %432 = vmatprep.subr.bf16.mxu0 0
    %433 = vmatpush1.bf16.msra.mxu0 %v417
    %434 = vmatprep.subr.bf16.mxu0 0
    %435 = vmatpush1.bf16.msra.mxu0 0
    %436 = vmatprep.subr.bf16.mxu0 0
    %437 = vmatpush1.bf16.msra.mxu0 0
    %438 = vmatprep.subr.bf16.mxu0 0
    %439 = vmatpush1.bf16.msra.mxu0 0
    %440 = vmatprep.subr.bf16.mxu0 0
    %441 = vmatpush1.bf16.msra.mxu0 0
    %442 = vmatprep.subr.bf16.mxu0 0
    %443 = vmatpush1.bf16.msra.mxu0 0
    %444 = vmatprep.subr.bf16.mxu0 0
    %445 = vmatpush1.bf16.msra.mxu0 0
    %446 = vmatprep.subr.bf16.mxu0 0
    %447 = vmatpush1.bf16.msra.mxu0 0
    %448 = vmatprep.subr.bf16.mxu0 0
    %449 = vmatpush1.bf16.msra.mxu0 0
    %450 = vmatprep.subr.bf16.mxu0 0
    %451 = vmatpush1.bf16.msra.mxu0 0
    %452 = vmatprep.subr.bf16.mxu0 0
    %453 = vmatpush1.bf16.msra.mxu0 0
    %454 = vmatprep.subr.bf16.mxu0 0
    %455 = vmatpush1.bf16.msra.mxu0 0
    %456 = vmatprep.subr.bf16.mxu0 0
    %457 = vmatpush1.bf16.msra.mxu0 0
    %458 = vmatprep.mubr.bf16.mxu0 0
    %459 = vmatmul.mubr.bf16.gmra.mrb[0].mxu0 %v424
    %v460 = vpop.f32.mrb[0].mxu0
    %v461 = vadd.f32 %v397, %v460
    %v462 = vpop.f32.mrb[0].mxu0
    %v463 = vpop.f32.mrb[0].mxu0
    %v464 = vpop.f32.mrb[0].mxu0
    %465 = vdwg.mxu0
    %v466 = vmul.f32 %v461, 0.1
    %v467 = vmax.f32 %v461, %v466
    %v468 = vld [vmem:[#allocation8 + $0x58] sm:$0xf]
    %v469 = vld [vmem:[#allocation8 + $0x5c] sm:$0xf]
    %v470 = vld [vmem:[#allocation8 + $0x60] sm:$0xf]
    %v471 = vld [vmem:[#allocation8 + $0x64] sm:$0xf]
    %v472 = vld [vmem:[#allocation8 + $0x68] sm:$0xf]
    %v473 = vld [vmem:[#allocation8 + $0x6c] sm:$0xf]
    %v474 = vld [vmem:[#allocation8 + $0x70] sm:$0xf]
    %v475 = vld [vmem:[#allocation8 + $0x74] sm:$0xf]
    %v476 = vpack.c.bf16 %v467, %v467
    %v477 = vld [vmem:[#allocation10 + $0x28] sm:$0x1]
    %v478 = vlaneseq
    %v479 = vshrl.u32 %v478, 7
    %v480 = vsub.s32 0, %v479
    %v481 = vrot.slane %v477, %v480
    %v490 = vunpack.c.l.b16 %v468
    %v491 = vunpack.c.l.b16 %v469
    %v492 = vunpack.c.l.b16 %v470
    %v493 = vunpack.c.l.b16 %v471
    %v494 = vunpack.c.l.b16 %v472
    %v495 = vunpack.c.l.b16 %v473
    %v496 = vunpack.c.l.b16 %v474
    %v497 = vunpack.c.l.b16 %v475
    %v498 = vpack.c.b16 %v491, %v490
    %v499 = vpack.c.b16 %v493, %v492
    %v500 = vpack.c.b16 %v495, %v494
    %v501 = vpack.c.b16 %v497, %v496
    %v507 = vsel %vm422, %v476, 0
    %509 = vmatprep.subr.bf16.mxu0 0
    %510 = vmatpush1.bf16.msra.mxu0 %v498
    %511 = vmatprep.subr.bf16.mxu0 0
    %512 = vmatpush1.bf16.msra.mxu0 %v499
    %513 = vmatprep.subr.bf16.mxu0 0
    %514 = vmatpush1.bf16.msra.mxu0 %v500
    %515 = vmatprep.subr.bf16.mxu0 0
    %516 = vmatpush1.bf16.msra.mxu0 %v501
    %517 = vmatprep.subr.bf16.mxu0 0
    %518 = vmatpush1.bf16.msra.mxu0 0
    %519 = vmatprep.subr.bf16.mxu0 0
    %520 = vmatpush1.bf16.msra.mxu0 0
    %521 = vmatprep.subr.bf16.mxu0 0
    %522 = vmatpush1.bf16.msra.mxu0 0
    %523 = vmatprep.subr.bf16.mxu0 0
    %524 = vmatpush1.bf16.msra.mxu0 0
    %525 = vmatprep.subr.bf16.mxu0 0
    %526 = vmatpush1.bf16.msra.mxu0 0
    %527 = vmatprep.subr.bf16.mxu0 0
    %528 = vmatpush1.bf16.msra.mxu0 0
    %529 = vmatprep.subr.bf16.mxu0 0
    %530 = vmatpush1.bf16.msra.mxu0 0
    %531 = vmatprep.subr.bf16.mxu0 0
    %532 = vmatpush1.bf16.msra.mxu0 0
    %533 = vmatprep.subr.bf16.mxu0 0
    %534 = vmatpush1.bf16.msra.mxu0 0
    %535 = vmatprep.subr.bf16.mxu0 0
    %536 = vmatpush1.bf16.msra.mxu0 0
    %537 = vmatprep.subr.bf16.mxu0 0
    %538 = vmatpush1.bf16.msra.mxu0 0
    %539 = vmatprep.subr.bf16.mxu0 0
    %540 = vmatpush1.bf16.msra.mxu0 0
    %541 = vmatprep.mubr.bf16.mxu0 0
    %542 = vmatmul.mubr.bf16.gmra.mrb[0].mxu0 %v507
    %v543 = vpop.f32.mrb[0].mxu0
    %v544 = vadd.f32 %v481, %v543
    %v545 = vpop.f32.mrb[0].mxu0
    %v546 = vpop.f32.mrb[0].mxu0
    %v547 = vpop.f32.mrb[0].mxu0
    %548 = vdwg.mxu0
    %v549 = vld [vmem:[#allocation8 + $0x78] sm:$0xf]
    %v550 = vld [vmem:[#allocation8 + $0x7c] sm:$0xf]
    %v551 = vld [vmem:[#allocation8 + $0x80] sm:$0xf]
    %v552 = vld [vmem:[#allocation8 + $0x84] sm:$0xf]
    %v553 = vld [vmem:[#allocation8 + $0x88] sm:$0xf]
    %v554 = vld [vmem:[#allocation8 + $0x8c] sm:$0xf]
    %v555 = vld [vmem:[#allocation8 + $0x90] sm:$0xf]
    %v556 = vld [vmem:[#allocation8 + $0x94] sm:$0xf]
    %v557 = vld [vmem:[#allocation10 + $0x30] sm:$0x1]
    %v558 = vlaneseq
    %v559 = vshrl.u32 %v558, 7
    %v560 = vsub.s32 0, %v559
    %v561 = vrot.slane %v557, %v560
    %v570 = vunpack.c.l.b16 %v549
    %v571 = vunpack.c.l.b16 %v550
    %v572 = vunpack.c.l.b16 %v551
    %v573 = vunpack.c.l.b16 %v552
    %v574 = vunpack.c.l.b16 %v553
    %v575 = vunpack.c.l.b16 %v554
    %v576 = vunpack.c.l.b16 %v555
    %v577 = vunpack.c.l.b16 %v556
    %v578 = vpack.c.b16 %v571, %v570
    %v579 = vpack.c.b16 %v573, %v572
    %v580 = vpack.c.b16 %v575, %v574
    %v581 = vpack.c.b16 %v577, %v576
    %586 = vmatprep.subr.bf16.mxu0 0
    %587 = vmatpush1.bf16.msra.mxu0 %v578
    %588 = vmatprep.subr.bf16.mxu0 0
    %589 = vmatpush1.bf16.msra.mxu0 %v579
    %590 = vmatprep.subr.bf16.mxu0 0
    %591 = vmatpush1.bf16.msra.mxu0 %v580
    %592 = vmatprep.subr.bf16.mxu0 0
    %593 = vmatpush1.bf16.msra.mxu0 %v581
    %594 = vmatprep.subr.bf16.mxu0 0
    %595 = vmatpush1.bf16.msra.mxu0 0
    %596 = vmatprep.subr.bf16.mxu0 0
    %597 = vmatpush1.bf16.msra.mxu0 0
    %598 = vmatprep.subr.bf16.mxu0 0
    %599 = vmatpush1.bf16.msra.mxu0 0
    %600 = vmatprep.subr.bf16.mxu0 0
    %601 = vmatpush1.bf16.msra.mxu0 0
    %602 = vmatprep.subr.bf16.mxu0 0
    %603 = vmatpush1.bf16.msra.mxu0 0
    %604 = vmatprep.subr.bf16.mxu0 0
    %605 = vmatpush1.bf16.msra.mxu0 0
    %606 = vmatprep.subr.bf16.mxu0 0
    %607 = vmatpush1.bf16.msra.mxu0 0
    %608 = vmatprep.subr.bf16.mxu0 0
    %609 = vmatpush1.bf16.msra.mxu0 0
    %610 = vmatprep.subr.bf16.mxu0 0
    %611 = vmatpush1.bf16.msra.mxu0 0
    %612 = vmatprep.subr.bf16.mxu0 0
    %613 = vmatpush1.bf16.msra.mxu0 0
    %614 = vmatprep.subr.bf16.mxu0 0
    %615 = vmatpush1.bf16.msra.mxu0 0
    %616 = vmatprep.subr.bf16.mxu0 0
    %617 = vmatpush1.bf16.msra.mxu0 0
    %618 = vmatprep.mubr.bf16.mxu0 0
    %619 = vmatmul.mubr.bf16.gmra.mrb[0].mxu0 %v507
    %v620 = vpop.f32.mrb[0].mxu0
    %v621 = vadd.f32 %v561, %v620
    %v622 = vpop.f32.mrb[0].mxu0
    %v623 = vpop.f32.mrb[0].mxu0
    %v624 = vpop.f32.mrb[0].mxu0
    %625 = vdwg.mxu0
    %v626 = vmul.f32 %v621, 0.5
    %v627 = vmul.f32 %v626, 1.442695
    %v628 = vpow.pop %v627
    %v629 = vmul.f32 %v628, %v628
    %v630 = vmul.f32 %v86, %v628
    %v631 = vadd.f32 %v544, %v630
    %v632 = vld [vmem:[#allocation8 + $0x98] sm:$0xf]
    %v633 = vpack.c.bf16 %v631, %v631
    %v634 = vld [vmem:[#allocation10 + $0x38] sm:$0x1]
    %v635 = vlaneseq
    %v636 = vshrl.u32 %v635, 7
    %v637 = vsub.s32 0, %v636
    %v638 = vrot.slane %v634, %v637
    %v640 = vsel %vm94, %v633, 0
    %v643 = vsel %vm98, %v632, 0
    %645 = vmatprep.subr.bf16.mxu0 0
    %646 = vmatpush1.bf16.msra.mxu0 %v643
    %647 = vmatprep.subr.bf16.mxu0 0
    %648 = vmatpush1.bf16.msra.mxu0 0
    %649 = vmatprep.subr.bf16.mxu0 0
    %650 = vmatpush1.bf16.msra.mxu0 0
    %651 = vmatprep.subr.bf16.mxu0 0
    %652 = vmatpush1.bf16.msra.mxu0 0
    %653 = vmatprep.subr.bf16.mxu0 0
    %654 = vmatpush1.bf16.msra.mxu0 0
    %655 = vmatprep.subr.bf16.mxu0 0
    %656 = vmatpush1.bf16.msra.mxu0 0
    %657 = vmatprep.subr.bf16.mxu0 0
    %658 = vmatpush1.bf16.msra.mxu0 0
    %659 = vmatprep.subr.bf16.mxu0 0
    %660 = vmatpush1.bf16.msra.mxu0 0
    %661 = vmatprep.subr.bf16.mxu0 0
    %662 = vmatpush1.bf16.msra.mxu0 0
    %663 = vmatprep.subr.bf16.mxu0 0
    %664 = vmatpush1.bf16.msra.mxu0 0
    %665 = vmatprep.subr.bf16.mxu0 0
    %666 = vmatpush1.bf16.msra.mxu0 0
    %667 = vmatprep.subr.bf16.mxu0 0
    %668 = vmatpush1.bf16.msra.mxu0 0
    %669 = vmatprep.subr.bf16.mxu0 0
    %670 = vmatpush1.bf16.msra.mxu0 0
    %671 = vmatprep.subr.bf16.mxu0 0
    %672 = vmatpush1.bf16.msra.mxu0 0
    %673 = vmatprep.subr.bf16.mxu0 0
    %674 = vmatpush1.bf16.msra.mxu0 0
    %675 = vmatprep.subr.bf16.mxu0 0
    %676 = vmatpush1.bf16.msra.mxu0 0
    %677 = vmatprep.mubr.bf16.mxu0 0
    %678 = vmatmul.mubr.bf16.gmra.mrb[0].mxu0 %v640
    %v679 = vpop.f32.mrb[0].mxu0
    %v680 = vadd.f32 %v638, %v679
    %v681 = vpop.f32.mrb[0].mxu0
    %v682 = vpop.f32.mrb[0].mxu0
    %v683 = vpop.f32.mrb[0].mxu0
    %684 = vdwg.mxu0
    %v685 = vmul.f32 %v680, 0.1
    %v686 = vmax.f32 %v680, %v685
    %v687 = vld [vmem:[#allocation8 + $0xa0] sm:$0xf]
    %v688 = vld [vmem:[#allocation8 + $0xa4] sm:$0xf]
    %v689 = vld [vmem:[#allocation8 + $0xa8] sm:$0xf]
    %v690 = vld [vmem:[#allocation8 + $0xac] sm:$0xf]
    %v691 = vpack.c.bf16 %v686, %v686
    %v692 = vld [vmem:[#allocation10 + $0x40] sm:$0x1]
    %v693 = vlaneseq
    %v694 = vshrl.u32 %v693, 7
    %v695 = vsub.s32 0, %v694
    %v696 = vrot.slane %v692, %v695
    %v701 = vunpack.c.l.b16 %v687
    %v702 = vunpack.c.l.b16 %v688
    %v703 = vunpack.c.l.b16 %v689
    %v704 = vunpack.c.l.b16 %v690
    %v705 = vpack.c.b16 %v702, %v701
    %v706 = vpack.c.b16 %v704, %v703
    %v710 = vsel %vm166, %v691, 0
    %712 = vmatprep.subr.bf16.mxu0 0
    %713 = vmatpush1.bf16.msra.mxu0 %v705
    %714 = vmatprep.subr.bf16.mxu0 0
    %715 = vmatpush1.bf16.msra.mxu0 %v706
    %716 = vmatprep.subr.bf16.mxu0 0
    %717 = vmatpush1.bf16.msra.mxu0 0
    %718 = vmatprep.subr.bf16.mxu0 0
    %719 = vmatpush1.bf16.msra.mxu0 0
    %720 = vmatprep.subr.bf16.mxu0 0
    %721 = vmatpush1.bf16.msra.mxu0 0
    %722 = vmatprep.subr.bf16.mxu0 0
    %723 = vmatpush1.bf16.msra.mxu0 0
    %724 = vmatprep.subr.bf16.mxu0 0
    %725 = vmatpush1.bf16.msra.mxu0 0
    %726 = vmatprep.subr.bf16.mxu0 0
    %727 = vmatpush1.bf16.msra.mxu0 0
    %728 = vmatprep.subr.bf16.mxu0 0
    %729 = vmatpush1.bf16.msra.mxu0 0
    %730 = vmatprep.subr.bf16.mxu0 0
    %731 = vmatpush1.bf16.msra.mxu0 0
    %732 = vmatprep.subr.bf16.mxu0 0
    %733 = vmatpush1.bf16.msra.mxu0 0
    %734 = vmatprep.subr.bf16.mxu0 0
    %735 = vmatpush1.bf16.msra.mxu0 0
    %736 = vmatprep.subr.bf16.mxu0 0
    %737 = vmatpush1.bf16.msra.mxu0 0
    %738 = vmatprep.subr.bf16.mxu0 0
    %739 = vmatpush1.bf16.msra.mxu0 0
    %740 = vmatprep.subr.bf16.mxu0 0
    %741 = vmatpush1.bf16.msra.mxu0 0
    %742 = vmatprep.subr.bf16.mxu0 0
    %743 = vmatpush1.bf16.msra.mxu0 0
    %744 = vmatprep.mubr.bf16.mxu0 0
    %745 = vmatmul.mubr.bf16.gmra.mrb[0].mxu0 %v710
    %v746 = vpop.f32.mrb[0].mxu0
    %v747 = vadd.f32 %v696, %v746
    %v748 = vpop.f32.mrb[0].mxu0
    %v749 = vpop.f32.mrb[0].mxu0
    %v750 = vpop.f32.mrb[0].mxu0
    %751 = vdwg.mxu0
    %v752 = vmul.f32 %v747, 0.1
    %v753 = vmax.f32 %v747, %v752
    %v754 = vld [vmem:[#allocation8 + $0xb0] sm:$0xf]
    %v755 = vld [vmem:[#allocation8 + $0xb4] sm:$0xf]
    %v756 = vld [vmem:[#allocation8 + $0xb8] sm:$0xf]
    %v757 = vld [vmem:[#allocation8 + $0xbc] sm:$0xf]
    %v758 = vpack.c.bf16 %v753, %v753
    %v759 = vld [vmem:[#allocation10 + $0x48] sm:$0x1]
    %v760 = vlaneseq
    %v761 = vshrl.u32 %v760, 7
    %v762 = vsub.s32 0, %v761
    %v763 = vrot.slane %v759, %v762
    %v768 = vunpack.c.l.b16 %v754
    %v769 = vunpack.c.l.b16 %v755
    %v770 = vunpack.c.l.b16 %v756
    %v771 = vunpack.c.l.b16 %v757
    %v772 = vpack.c.b16 %v769, %v768
    %v773 = vpack.c.b16 %v771, %v770
    %v777 = vsel %vm166, %v758, 0
    %779 = vmatprep.subr.bf16.mxu0 0
    %780 = vmatpush1.bf16.msra.mxu0 %v772
    %781 = vmatprep.subr.bf16.mxu0 0
    %782 = vmatpush1.bf16.msra.mxu0 %v773
    %783 = vmatprep.subr.bf16.mxu0 0
    %784 = vmatpush1.bf16.msra.mxu0 0
    %785 = vmatprep.subr.bf16.mxu0 0
    %786 = vmatpush1.bf16.msra.mxu0 0
    %787 = vmatprep.subr.bf16.mxu0 0
    %788 = vmatpush1.bf16.msra.mxu0 0
    %789 = vmatprep.subr.bf16.mxu0 0
    %790 = vmatpush1.bf16.msra.mxu0 0
    %791 = vmatprep.subr.bf16.mxu0 0
    %792 = vmatpush1.bf16.msra.mxu0 0
    %793 = vmatprep.subr.bf16.mxu0 0
    %794 = vmatpush1.bf16.msra.mxu0 0
    %795 = vmatprep.subr.bf16.mxu0 0
    %796 = vmatpush1.bf16.msra.mxu0 0
    %797 = vmatprep.subr.bf16.mxu0 0
    %798 = vmatpush1.bf16.msra.mxu0 0
    %799 = vmatprep.subr.bf16.mxu0 0
    %800 = vmatpush1.bf16.msra.mxu0 0
    %801 = vmatprep.subr.bf16.mxu0 0
    %802 = vmatpush1.bf16.msra.mxu0 0
    %803 = vmatprep.subr.bf16.mxu0 0
    %804 = vmatpush1.bf16.msra.mxu0 0
    %805 = vmatprep.subr.bf16.mxu0 0
    %806 = vmatpush1.bf16.msra.mxu0 0
    %807 = vmatprep.subr.bf16.mxu0 0
    %808 = vmatpush1.bf16.msra.mxu0 0
    %809 = vmatprep.subr.bf16.mxu0 0
    %810 = vmatpush1.bf16.msra.mxu0 0
    %811 = vmatprep.mubr.bf16.mxu0 0
    %812 = vmatmul.mubr.bf16.gmra.mrb[0].mxu0 %v777
    %v813 = vpop.f32.mrb[0].mxu0
    %v814 = vadd.f32 %v763, %v813
    %v815 = vpop.f32.mrb[0].mxu0
    %v816 = vpop.f32.mrb[0].mxu0
    %v817 = vpop.f32.mrb[0].mxu0
    %818 = vdwg.mxu0
    %820 = vrot.lane.b32.xlu0 %v544, 16
    %v821 = vpop.permute.xlu0 %820
    %824 = vrot.lane.b32.xlu0 %v629, 24
    %v825 = vpop.permute.xlu0 %824
    %828 = vrot.lane.b32.xlu0 %v631, 32
    %v829 = vpop.permute.xlu0 %828
    %832 = vrot.lane.b32.xlu0 %v278, 40
    %v833 = vpop.permute.xlu0 %832
    %v835 = vsel %vm332, %v814, %v821
    %vm836 = vcmask 195584
    %v837 = vsel %vm836, %v835, %v825
    %v838 = vsel %vm166, %v837, %v829
    %vm839 = vcmask 326656
    %v840 = vsel %vm839, %v838, %v833
    %vm841 = vcmask 392192
    %842 = vst.msk [vmem:[#allocation11] sm:$0xff] %vm841, %v840
    // Predicated region
    $region42: #{tpu_custom_call.1} parent=1 // pred_check
      _
    $region43: #{tpu_custom_call.1} parent=1 // pred_check_branch
      %844 = sbr.rel (0) target = $region45
    $region44: #{tpu_custom_call.1} parent=1 // pred_region
      %s846 = ssub.s32 128, 128
      %847 = vsyncadd [#allocation4], %s846
      %s849 = sshll.u32 [#allocation11], 4
      %s850 = int_to_ptr.vmem [resolvable:$true] %s849
      %852 = dma.vmem_to_hbm [thread:$0]  %s850, 128, %s5, [#allocation4]
    $region45: #{tpu_custom_call.1} parent=1 // pred_fallthru
      _
    // Predicated region
    $region46: #{tpu_custom_call.1} parent=1 // pred_check
      _
    $region47: #{tpu_custom_call.1} parent=1 // pred_check_branch
      %854 = sbr.rel (0) target = $region49
    $region48: #{tpu_custom_call.1} parent=1 // pred_region
      %855 = dma.done [#allocation4], 128
    $region49: #{tpu_custom_call.1} parent=1 // pred_fallthru
      _
    %856 = vsyncpa [#allocation3], 1
    %857 = vsyncpa [#allocation6], 1
    %858 = vsyncpa [#allocation9], 1
    %859 = vsyncpa [#allocation4], 1

</llo_original>
